<compile_context>
chip_gen: v5e
topology: v5e:2x2
jax: 0.10.0
libtpu: 0.0.40
codegen_flags: <defaults>
</compile_context>

<pallas_src>
import jax
import jax.numpy as jnp
from jax.experimental import pallas as pl
from jax.experimental.pallas import tpu as pltpu


def _round_up(n, m):
    return ((n + m - 1) // m) * m


def _pick_f_tile(B, F, requested=None):
    """Lane-dense feature tile (multiple of 128) sized for VMEM headroom."""
    if requested is not None:
        return max(128, _round_up(requested, 128))
    # Double-buffered x + y tiles cost ~ 2 * 2 * 4 * B * f_tile bytes (f32).
    # Keep that under ~24 MiB so it fits v7x's scoped VMEM with headroom.
    budget = 24 * 1024 * 1024
    cap = max(128, (budget // (16 * max(B, 1))) // 128 * 128)
    f_tile = min(512, cap)
    if F <= f_tile:
        f_tile = _round_up(F, 128)
    return f_tile


def _batch_scale_train_kernel(x_ref, mean_ref, inv_ns_ref, y_ref, new_mean_ref):
    # x_ref: (B, F_TILE), mean_ref: (1, F_TILE), inv_ns_ref: (1,) f32 in SMEM
    x = x_ref[...].astype(jnp.float32)
    mb = jnp.float32(x.shape[0])                        # static mini-batch size

    batch_sum = jnp.sum(x, axis=0, keepdims=True)       # (1, F_TILE), f32 accum
    rm = mean_ref[...]                                  # (1, F_TILE)
    updated = rm + (batch_sum - mb * rm) * inv_ns_ref[0]
    new_mean_ref[...] = updated

    # One reciprocal per feature column (exact), broadcast-multiply over batch.
    inv = 1.0 / (updated + jnp.float32(1e-6))           # (1, F_TILE)
    y_ref[...] = (x * inv).astype(y_ref.dtype)


def _batch_scale_eval_kernel(x_ref, mean_ref, y_ref):
    inv = 1.0 / (mean_ref[...] + jnp.float32(1e-6))     # (1, F_TILE)
    y_ref[...] = (x_ref[...].astype(jnp.float32) * inv).astype(y_ref.dtype)


def batch_scale_forward(x, running_mean, num_samples, training=True, f_tile=None):
    """JAX wrapper mirroring BatchScale.forward.

    Returns (y, new_running_mean, new_num_samples) in training mode,
    (y, running_mean, num_samples) in eval mode (buffers unchanged).
    """
    B, F = x.shape
    ft = _pick_f_tile(B, F, f_tile)
    F_pad = _round_up(F, ft)
    n_tiles = F_pad // ft

    rm2 = running_mean.astype(jnp.float32).reshape(1, F)
    if F_pad != F:
        # Pad in the wrapper so every output block is lane-dense (no masked
        # sub-128 stores).  Padded x columns are zero -> padded y/mean are zero.
        x_p = jnp.pad(x, ((0, 0), (0, F_pad - F)))
        rm_p = jnp.pad(rm2, ((0, 0), (0, F_pad - F)))
    else:
        x_p, rm_p = x, rm2

    cparams = pltpu.CompilerParams(dimension_semantics=("parallel",))

    if training:
        # Scalar buffer update done in plain XLA (trivial), reciprocal passed in.
        new_ns = jnp.asarray(num_samples, jnp.float32) + jnp.float32(B)
        inv_ns = (1.0 / new_ns).reshape(1)

        y_p, new_mean_p = pl.pallas_call(
            _batch_scale_train_kernel,
            grid=(n_tiles,),
            in_specs=[
                pl.BlockSpec((B, ft), lambda j: (0, j)),
                pl.BlockSpec((1, ft), lambda j: (0, j)),
                pl.BlockSpec(memory_space=pltpu.SMEM),
            ],
            out_specs=(
                pl.BlockSpec((B, ft), lambda j: (0, j)),
                pl.BlockSpec((1, ft), lambda j: (0, j)),
            ),
            out_shape=(
                jax.ShapeDtypeStruct((B, F_pad), x.dtype),
                jax.ShapeDtypeStruct((1, F_pad), jnp.float32),
            ),
            compiler_params=cparams,
        )(x_p, rm_p, inv_ns)

        y = y_p[:, :F]
        new_mean = new_mean_p[0, :F]
        return y, new_mean, new_ns
    else:
        y_p = pl.pallas_call(
            _batch_scale_eval_kernel,
            grid=(n_tiles,),
            in_specs=[
                pl.BlockSpec((B, ft), lambda j: (0, j)),
                pl.BlockSpec((1, ft), lambda j: (0, j)),
            ],
            out_specs=pl.BlockSpec((B, ft), lambda j: (0, j)),
            out_shape=jax.ShapeDtypeStruct((B, F_pad), x.dtype),
            compiler_params=cparams,
        )(x_p, rm_p)
        return y_p[:, :F], running_mean, jnp.asarray(num_samples, jnp.float32)


def _reference_forward(x, running_mean, num_samples, training=True):
    """Pure-JAX reference matching the PyTorch module exactly."""
    if training:
        mb = jnp.float32(x.shape[0])
        new_ns = num_samples + mb
        new_sum = jnp.sum(x.astype(jnp.float32), axis=0)
        delta = (new_sum - mb * running_mean) / new_ns
        new_mean = running_mean + delta
        y = x / (new_mean + 1e-6)
        return y, new_mean, new_ns
    y = x / (running_mean + 1e-6)
    return y, running_mean, num_samples


if __name__ == "__main__":
    key = jax.random.PRNGKey(0)
    k1, k2 = jax.random.split(key)

    # --- case 1: F a multiple of 128 (single default tile + explicit 128 tiles)
    B, F = 8, 384
    running_mean = jnp.zeros((F,), jnp.float32)
    num_samples = jnp.float32(0.0)
    x = jax.random.normal(k1, (B, F), jnp.float32) + 2.0  # keep away from 0

    # training step, default tile selection
    y, rm1, ns1 = batch_scale_forward(x, running_mean, num_samples, training=True)
    jax.block_until_ready((y, rm1, ns1))
    y_ref, rm1_ref, ns1_ref = _reference_forward(x, running_mean, num_samples, True)
    assert jnp.allclose(y, y_ref, rtol=1e-5, atol=1e-5)
    assert jnp.allclose(rm1, rm1_ref, rtol=1e-5, atol=1e-5)
    assert jnp.allclose(ns1, ns1_ref)

    # training step again with a forced 128-wide tile (multi-tile pipelined grid)
    y_b, rm_b, ns_b = batch_scale_forward(
        x, running_mean, num_samples, training=True, f_tile=128)
    jax.block_until_ready((y_b, rm_b, ns_b))
    assert jnp.allclose(y_b, y_ref, rtol=1e-5, atol=1e-5)
    assert jnp.allclose(rm_b, rm1_ref, rtol=1e-5, atol=1e-5)
    assert jnp.allclose(ns_b, ns1_ref)

    # eval step using the updated buffers
    y2, _, _ = batch_scale_forward(x, rm1, ns1, training=False)
    jax.block_until_ready(y2)
    y2_ref, _, _ = _reference_forward(x, rm1_ref, ns1_ref, False)
    assert jnp.allclose(y2, y2_ref, rtol=1e-5, atol=1e-5)

    # --- case 2: F not a multiple of 128 (exercises wrapper-side lane padding)
    B2, F2 = 4, 200
    rm0_2 = jnp.zeros((F2,), jnp.float32)
    ns0_2 = jnp.float32(0.0)
    x2 = jax.random.normal(k2, (B2, F2), jnp.float32) + 2.0

    y3, rm3, ns3 = batch_scale_forward(x2, rm0_2, ns0_2, training=True)
    jax.block_until_ready((y3, rm3, ns3))
    y3_ref, rm3_ref, ns3_ref = _reference_forward(x2, rm0_2, ns0_2, True)
    assert jnp.allclose(y3, y3_ref, rtol=1e-5, atol=1e-5)
    assert jnp.allclose(rm3, rm3_ref, rtol=1e-5, atol=1e-5)
    assert jnp.allclose(ns3, ns3_ref)

    y4, _, _ = batch_scale_forward(x2, rm3, ns3, training=False)
    jax.block_until_ready(y4)
    y4_ref, _, _ = _reference_forward(x2, rm3_ref, ns3_ref, False)
    assert jnp.allclose(y4, y4_ref, rtol=1e-5, atol=1e-5)

    print("KERNEL_OK")
</pallas_src>

<mosaic_0001>
module attributes {stable_mosaic.version = 11 : i64} {
  func.func @_batch_scale_train_kernel(%arg0: i32, %arg1: memref<8x384xf32, #tpu.memory_space<vmem>>, %arg2: memref<1x384xf32, #tpu.memory_space<vmem>>, %arg3: memref<1xf32, #tpu.memory_space<smem>>, %arg4: memref<8x384xf32, #tpu.memory_space<vmem>>, %arg5: memref<1x384xf32, #tpu.memory_space<vmem>>) attributes {dimension_semantics = [#tpu.dimension_semantics<parallel>], iteration_bounds = array<i64: 1>, scalar_prefetch = 0 : i64, scratch_operands = 0 : i64, tpu.core_type = #tpu.core_type<tc>, window_params = [{transform_indices = @transform_0, window_bounds = array<i64: 8, 384>}, {transform_indices = @transform_1, window_bounds = array<i64: 1, 384>}, {transform_indices = @transform_2, window_bounds = array<i64: 1>}, {transform_indices = @transform_3, window_bounds = array<i64: 8, 384>}, {transform_indices = @transform_4, window_bounds = array<i64: 1, 384>}]} {
    %c0 = arith.constant 0 : index
    %c0_0 = arith.constant 0 : index
    %0 = vector.load %arg1[%c0, %c0_0] : memref<8x384xf32, #tpu.memory_space<vmem>>, vector<8x384xf32>
    %cst = arith.constant dense<0.000000e+00> : vector<384xf32>
    %1 = vector.multi_reduction <add>, %0, %cst [0] : vector<8x384xf32> to vector<384xf32>
    %2 = vector.shape_cast %1 : vector<384xf32> to vector<1x384xf32>
    %c0_1 = arith.constant 0 : index
    %c0_2 = arith.constant 0 : index
    %3 = vector.load %arg2[%c0_1, %c0_2] : memref<1x384xf32, #tpu.memory_space<vmem>>, vector<1x384xf32>
    %cst_3 = arith.constant 8.000000e+00 : f32
    %4 = vector.broadcast %cst_3 : f32 to vector<1x384xf32>
    %5 = arith.mulf %4, %3 : vector<1x384xf32>
    %6 = arith.subf %2, %5 : vector<1x384xf32>
    %c0_4 = arith.constant 0 : index
    %7 = memref.load %arg3[%c0_4] : memref<1xf32, #tpu.memory_space<smem>>
    %8 = vector.broadcast %7 : f32 to vector<1x384xf32>
    %9 = arith.mulf %6, %8 : vector<1x384xf32>
    %10 = arith.addf %3, %9 : vector<1x384xf32>
    %c0_5 = arith.constant 0 : index
    %c0_6 = arith.constant 0 : index
    %11 = vector.load %arg5[%c0_5, %c0_6] : memref<1x384xf32, #tpu.memory_space<vmem>>, vector<1x384xf32>
    tpu.vector_store %arg5[%c0_5, %c0_6], %10 {strides = array<i32>} : memref<1x384xf32, #tpu.memory_space<vmem>>, vector<1x384xf32>,
    %cst_7 = arith.constant 9.99999997E-7 : f32
    %12 = vector.broadcast %cst_7 : f32 to vector<1x384xf32>
    %13 = arith.addf %10, %12 : vector<1x384xf32>
    %cst_8 = arith.constant 1.000000e+00 : f32
    %14 = vector.broadcast %cst_8 : f32 to vector<1x384xf32>
    %15 = arith.divf %14, %13 : vector<1x384xf32>
    %16 = vector.broadcast %15 : vector<1x384xf32> to vector<8x384xf32>
    %17 = arith.mulf %0, %16 : vector<8x384xf32>
    %c0_9 = arith.constant 0 : index
    %c0_10 = arith.constant 0 : index
    %18 = vector.load %arg4[%c0_9, %c0_10] : memref<8x384xf32, #tpu.memory_space<vmem>>, vector<8x384xf32>
    tpu.vector_store %arg4[%c0_9, %c0_10], %17 {strides = array<i32>} : memref<8x384xf32, #tpu.memory_space<vmem>>, vector<8x384xf32>,
    return
  }
  func.func @transform_0(%arg0: i32) -> (i32, i32) {
    %c0_i32 = arith.constant 0 : i32
    %c0_i32_0 = arith.constant 0 : i32
    return %c0_i32, %arg0 : i32, i32
  }
  func.func @transform_1(%arg0: i32) -> (i32, i32) {
    %c0_i32 = arith.constant 0 : i32
    %c0_i32_0 = arith.constant 0 : i32
    return %c0_i32, %arg0 : i32, i32
  }
  func.func @transform_2(%arg0: i32) -> i32 {
    %c0_i32 = arith.constant 0 : i32
    %c0_i32_0 = arith.constant 0 : i32
    return %c0_i32 : i32
  }
  func.func @transform_3(%arg0: i32) -> (i32, i32) {
    %c0_i32 = arith.constant 0 : i32
    %c0_i32_0 = arith.constant 0 : i32
    return %c0_i32, %arg0 : i32, i32
  }
  func.func @transform_4(%arg0: i32) -> (i32, i32) {
    %c0_i32 = arith.constant 0 : i32
    %c0_i32_0 = arith.constant 0 : i32
    return %c0_i32, %arg0 : i32, i32
  }
}

</mosaic_0001>

<llo_original>
// kernel: tpu_custom_call.1
$region0: #{tpu_custom_call.1}
  #allocation0 [shape = 'u32[]', space=smem, size = 0x4, offset = 0x4, fixed_abs, tag = 'smem constant byte address 0x4 - core index']
  #allocation1 [shape = 'u32[72,128]{1,0:T(1,128)}', space=vmem, size = 0x9000, scoped, tag = 'internal scratch']
  #allocation2 [shape = 'f32[1]{0:T(128)S(6)}', space=smem, size = 0x200, scoped, tag = 'scoped memory for tpu_custom_call.1']
  %s0 = inlined_call_operand.hbm [shape: f32[8,384], index: 0, kind: input, shape index: {}]
  %s1 = inlined_call_operand.hbm [shape: f32[1,384], index: 1, kind: input, shape index: {}]
  %s2 = inlined_call_operand.<no memory space> [shape: f32[1], index: 2, kind: input, shape index: {}]
  %s3 = inlined_call_operand.hbm [shape: f32[8,384], index: 3, kind: output, shape index: {0}]
  %s4 = inlined_call_operand.hbm [shape: f32[1,384], index: 4, kind: output, shape index: {1}]
  %5 = xla_tuple %s3, %s4
  %s6 = sld [smem:[#allocation0]]
  $region38: #{tpu_custom_call.1} parent=0
    _
  %s8 = ssub.s32 1, %s6
  %s9 = scalar_select 0, %s8, %s6
  %10 = sst [smem:[#allocation2]] %s2
  $region1: #{tpu_custom_call.1} parent=0
    #allocation3 [shape = 'u8[12288]{0}', space=vmem, size = 0x3000, scoped, tag = 'input window, operand 0, single buffered']
    #allocation4 [shape = 's32[1]{0}', space=sflag, size = 0x4, scoped, tag = 'scoped memory for tpu_custom_call.1']
    #allocation5 [shape = 's32[1]{0}', space=sflag, size = 0x4, scoped, tag = 'scoped memory for tpu_custom_call.1']
    #allocation6 [shape = 'u8[1536]{0}', space=vmem, size = 0x800, scoped, tag = 'input window, operand 1, single buffered']
    #allocation7 [shape = 's32[1]{0}', space=sflag, size = 0x4, scoped, tag = 'scoped memory for tpu_custom_call.1']
    #allocation8 [shape = 'u8[12288]{0}', space=vmem, size = 0x3000, scoped, tag = 'output window, operand 0, single buffered']
    #allocation9 [shape = 'u8[1536]{0}', space=vmem, size = 0x800, scoped, tag = 'output window, operand 1, single buffered']
    #allocation10 [shape = 's32[1]{0}', space=sflag, size = 0x4, scoped, tag = 'scoped memory for tpu_custom_call.1']
    %11 = vsyncpa [#allocation4], 0
    %12 = vsyncpa [#allocation7], 0
    %13 = vsyncpa [#allocation5], 0
    %14 = vsyncpa [#allocation10], 0
    // Predicated region
    $region2: #{tpu_custom_call.1} parent=1 // pred_check
      _
    $region3: #{tpu_custom_call.1} parent=1 // pred_check_branch
      %16 = sbr.rel (0) target = $region5
    $region4: #{tpu_custom_call.1} parent=1 // pred_region
      %18 = vsyncadd [#allocation4], 0
      %s20 = sshll.u32 %s0, 4
      %s21 = int_to_ptr.hbm [resolvable:$true] %s20
      %s22 = sshll.u32 [#allocation3], 4
      %s23 = int_to_ptr.vmem [resolvable:$true] %s22
      %25 = dma.hbm_to_vmem [thread:$0]  %s21, 384, %s23, [#allocation4]
    $region5: #{tpu_custom_call.1} parent=1 // pred_fallthru
      _
    // Predicated region
    $region6: #{tpu_custom_call.1} parent=1 // pred_check
      _
    $region7: #{tpu_custom_call.1} parent=1 // pred_check_branch
      %27 = sbr.rel (0) target = $region9
    $region8: #{tpu_custom_call.1} parent=1 // pred_region
      %29 = vsyncadd [#allocation7], 0
      %s31 = sshll.u32 %s1, 4
      %s32 = int_to_ptr.hbm [resolvable:$true] %s31
      %s33 = sshll.u32 [#allocation6], 4
      %s34 = int_to_ptr.vmem [resolvable:$true] %s33
      %36 = dma.hbm_to_vmem [thread:$0]  %s32, 48, %s34, [#allocation7]
    $region9: #{tpu_custom_call.1} parent=1 // pred_fallthru
      _
    // Predicated region
    $region10: #{tpu_custom_call.1} parent=1 // pred_check
      _
    $region11: #{tpu_custom_call.1} parent=1 // pred_check_branch
      %38 = sbr.rel (0) target = $region13
    $region12: #{tpu_custom_call.1} parent=1 // pred_region
      _
    $region13: #{tpu_custom_call.1} parent=1 // pred_fallthru
      _
    // Predicated region
    $region14: #{tpu_custom_call.1} parent=1 // pred_check
      _
    $region15: #{tpu_custom_call.1} parent=1 // pred_check_branch
      %40 = sbr.rel (0) target = $region17
    $region16: #{tpu_custom_call.1} parent=1 // pred_region
      %42 = dma.done [#allocation4], 384
    $region17: #{tpu_custom_call.1} parent=1 // pred_fallthru
      _
    // Predicated region
    $region18: #{tpu_custom_call.1} parent=1 // pred_check
      _
    $region19: #{tpu_custom_call.1} parent=1 // pred_check_branch
      %44 = sbr.rel (0) target = $region21
    $region20: #{tpu_custom_call.1} parent=1 // pred_region
      %46 = dma.done [#allocation7], 48
    $region21: #{tpu_custom_call.1} parent=1 // pred_fallthru
      _
    %v47 = vld [vmem:[#allocation3] sm:$0xff]
    %v48 = vld [vmem:[#allocation3 + $0x8] sm:$0xff]
    %v49 = vld [vmem:[#allocation3 + $0x10] sm:$0xff]
    %v50 = vrot.slane %v47, 4
    %v51 = vadd.f32 %v47, %v50
    %v52 = vrot.slane %v51, 2
    %v53 = vadd.f32 %v51, %v52
    %v54 = vrot.slane %v53, 1
    %v55 = vadd.f32 %v53, %v54
    %v56 = vrot.slane %v48, 4
    %v57 = vadd.f32 %v48, %v56
    %v58 = vrot.slane %v57, 2
    %v59 = vadd.f32 %v57, %v58
    %v60 = vrot.slane %v59, 1
    %v61 = vadd.f32 %v59, %v60
    %v62 = vrot.slane %v49, 4
    %v63 = vadd.f32 %v49, %v62
    %v64 = vrot.slane %v63, 2
    %v65 = vadd.f32 %v63, %v64
    %v66 = vrot.slane %v65, 1
    %v67 = vadd.f32 %v65, %v66
    %v68 = vld [vmem:[#allocation6] sm:$0x7]
    %v69 = vmul.f32 %v68, 8.0
    %v71 = vperm.slane %v69, 0
    %v72 = vperm.slane %v69, 1
    %v73 = vperm.slane %v69, 2
    %v77 = vsub.f32 %v55, %v71
    %v78 = vsub.f32 %v61, %v72
    %v79 = vsub.f32 %v67, %v73
    %s80 = sld [smem:[#allocation2]]
    %v81 = vstv %s80
    %v82 = vmul.f32 %v77, %v81
    %v83 = vmul.f32 %v78, %v81
    %v84 = vmul.f32 %v79, %v81
    %v88 = vrot.slane %v83, 7
    %v89 = vrot.slane %v84, 6
    %vm90 = vcmask 1040384
    %v91 = vsel %vm90, %v82, %v88
    %vm92 = vcmask 1041408
    %v93 = vsel %vm92, %v91, %v89
    %v95 = vadd.f32 %v68, %v93
    %v96 = vlaneseq
    %vm97 = vcmp.ge.s32.totalorder %v96, 0
    %vm98 = vcmp.lt.s32.totalorder %v96, 384
    %vm99 = vmand %vm97, %vm98
    %100 = vst.msk [vmem:[#allocation9] sm:$0x7] %vm99, %v95
    %v101 = vadd.f32 %v95, 1e-06
    %v102 = vrcp.pop %v101
    %v103 = vmul.f32 %v101, %v102
    %v104 = vsub.f32 1.0, %v103
    %v105 = vmul.f32 %v102, %v104
    %v106 = vadd.f32 %v102, %v105
    %vm107 = vweird.f32 %v101
    %vm108 = vweird.f32 %v102
    %vm109 = vmor %vm107, %vm108
    %v110 = vsel %vm109, %v102, %v106
    %v111 = vand.u32 2147483647, %v101
    %vm112 = vcmp.eq.f32.partialorder %v111, 8.507059e+37
    %v113 = vand.u32 %v101, 2147483648
    %v114 = vor.u32 1.1754944e-38, %v113
    %v115 = vsel %vm112, %v114, %v110
    %v116 = vmul.f32 1.0, %v115
    %v118 = vperm.slane %v116, 0
    %v119 = vperm.slane %v116, 1
    %v120 = vperm.slane %v116, 2
    %v124 = vmul.f32 %v47, %v118
    %v125 = vmul.f32 %v48, %v119
    %v126 = vmul.f32 %v49, %v120
    %127 = vst [vmem:[#allocation8] sm:$0xff] %v124
    %128 = vst [vmem:[#allocation8 + $0x8] sm:$0xff] %v125
    %129 = vst [vmem:[#allocation8 + $0x10] sm:$0xff] %v126
    // Predicated region
    $region22: #{tpu_custom_call.1} parent=1 // pred_check
      _
    $region23: #{tpu_custom_call.1} parent=1 // pred_check_branch
      %131 = sbr.rel (0) target = $region25
    $region24: #{tpu_custom_call.1} parent=1 // pred_region
      %133 = vsyncadd [#allocation5], 0
      %s135 = sshll.u32 [#allocation8], 4
      %s136 = int_to_ptr.vmem [resolvable:$true] %s135
      %s137 = sshll.u32 %s3, 4
      %s138 = int_to_ptr.hbm [resolvable:$true] %s137
      %140 = dma.vmem_to_hbm [thread:$0]  %s136, 384, %s138, [#allocation5]
    $region25: #{tpu_custom_call.1} parent=1 // pred_fallthru
      _
    // Predicated region
    $region26: #{tpu_custom_call.1} parent=1 // pred_check
      _
    $region27: #{tpu_custom_call.1} parent=1 // pred_check_branch
      %142 = sbr.rel (0) target = $region29
    $region28: #{tpu_custom_call.1} parent=1 // pred_region
      %144 = vsyncadd [#allocation10], 0
      %s146 = sshll.u32 [#allocation9], 4
      %s147 = int_to_ptr.vmem [resolvable:$true] %s146
      %s148 = sshll.u32 %s4, 4
      %s149 = int_to_ptr.hbm [resolvable:$true] %s148
      %151 = dma.vmem_to_hbm [thread:$0]  %s147, 48, %s149, [#allocation10]
    $region29: #{tpu_custom_call.1} parent=1 // pred_fallthru
      _
    // Predicated region
    $region30: #{tpu_custom_call.1} parent=1 // pred_check
      _
    $region31: #{tpu_custom_call.1} parent=1 // pred_check_branch
      %153 = sbr.rel (0) target = $region33
    $region32: #{tpu_custom_call.1} parent=1 // pred_region
      %155 = dma.done [#allocation5], 384
    $region33: #{tpu_custom_call.1} parent=1 // pred_fallthru
      _
    // Predicated region
    $region34: #{tpu_custom_call.1} parent=1 // pred_check
      _
    $region35: #{tpu_custom_call.1} parent=1 // pred_check_branch
      %157 = sbr.rel (0) target = $region37
    $region36: #{tpu_custom_call.1} parent=1 // pred_region
      %159 = dma.done [#allocation10], 48
    $region37: #{tpu_custom_call.1} parent=1 // pred_fallthru
      _
    %160 = vsyncpa [#allocation4], 1
    %161 = vsyncpa [#allocation7], 1
    %162 = vsyncpa [#allocation5], 1
    %163 = vsyncpa [#allocation10], 1

</llo_original>
